<compile_context>
chip_gen: v7x
topology: tpu7x:2x2x1
jax: 0.10.0
libtpu: 0.0.40
codegen_flags: <defaults>
</compile_context>

<pallas_src>
import jax
import jax.numpy as jnp
from jax.experimental import pallas as pl
from jax.experimental.pallas import tpu as pltpu


def logreg_kernel(x_ref, w_ref, b_ref, o_ref):
    """x_ref: (TB, F), w_ref: (8, F) (row 0 = real weights, rows 1..7 zero),
    b_ref: (1, 1) in SMEM, o_ref: (1, 1, TB)."""
    # Contract on the feature axis of both operands -> (8, TB).
    # This keeps the logits lane-dense (TB on lanes), so the sigmoid and the
    # output store work on fully packed vregs instead of a (TB, 1) column.
    z8 = jax.lax.dot_general(
        w_ref[...], x_ref[...],
        dimension_numbers=(((1,), (1,)), ((), ())),
        preferred_element_type=jnp.float32,
        precision=jax.lax.Precision.HIGHEST,
    )
    z = z8[0:1, :] + b_ref[0, 0]                      # (1, TB) + scalar bias (SMEM)
    o_ref[...] = jax.nn.sigmoid(z)[None].astype(o_ref.dtype)


def logistic_regression(x, weight, bias, *, target_tile_bytes=4 * 1024 * 1024):
    """x: (B, F) f32, weight: (1, F) f32 (PyTorch nn.Linear layout), bias: (1,) f32
    -> (B, 1) f32, equal to torch.sigmoid(nn.Linear(F, 1)(x))."""
    B, F = x.shape
    assert weight.shape == (1, F)

    # Rows per batch tile: ~target_tile_bytes per x buffer (double-buffered by
    # the pipeline), multiple of 128 so the lane-dense output tile is unmasked,
    # and no larger than the 128-rounded batch itself.
    tb = max(128, (target_tile_bytes // (F * 4)) // 128 * 128)
    tb = min(tb, pl.cdiv(B, 128) * 128)
    num_tiles = pl.cdiv(B, tb)
    b_pad = num_tiles * tb

    x_p = x if b_pad == B else jnp.pad(x, ((0, b_pad - B), (0, 0)))
    # Pad the weight row to the 8-sublane granularity; rows 1..7 are zeros and
    # their (discarded) logits cost nothing extra on the MXU.
    w_pad = jnp.zeros((8, F), jnp.float32).at[0, :].set(weight[0].astype(jnp.float32))
    b_smem = jnp.asarray(bias, jnp.float32).reshape(1, 1)

    # NOTE: F is a single block here; for very large n_features add a trailing
    # "arbitrary" K grid axis with a VMEM accumulator (not needed for F=32).
    out = pl.pallas_call(
        logreg_kernel,
        out_shape=jax.ShapeDtypeStruct((num_tiles, 1, tb), jnp.float32),
        grid_spec=pltpu.PrefetchScalarGridSpec(
            num_scalar_prefetch=0,
            grid=(num_tiles,),
            in_specs=[
                pl.BlockSpec((tb, F), lambda i: (i, 0)),             # streamed x tiles
                pl.BlockSpec((8, F), lambda i: (0, 0)),              # resident weights
                pl.BlockSpec(memory_space=pltpu.MemorySpace.SMEM),   # bias scalar
            ],
            out_specs=pl.BlockSpec((1, 1, tb), lambda i: (i, 0, 0)),
        ),
        compiler_params=pltpu.CompilerParams(
            dimension_semantics=("parallel",),   # shard batch tiles across TCs (v7x)
            vmem_limit_bytes=48 * 1024 * 1024,   # > v5e's 16 MiB default, < v7x's 64 MiB
        ),
    )(x_p, w_pad, b_smem)

    return out.reshape(b_pad)[:B].reshape(B, 1)


if __name__ == "__main__":
    key = jax.random.PRNGKey(0)
    kx, kw, kb, kx2 = jax.random.split(key, 4)

    batch = 8
    n_input_features = 32

    x = jax.random.normal(kx, (batch, n_input_features), dtype=jnp.float32)
    # Deterministic init mimicking nn.Linear(n_input_features, 1):
    # weight (1, F), bias (1,), uniform(-1/sqrt(F), 1/sqrt(F)).
    bound = 1.0 / jnp.sqrt(n_input_features)
    weight = jax.random.uniform(kw, (1, n_input_features), jnp.float32, -bound, bound)
    bias = jax.random.uniform(kb, (1,), jnp.float32, -bound, bound)

    def ref_fn(xv):
        z = jnp.dot(xv, weight.T, precision=jax.lax.Precision.HIGHEST) + bias
        return jax.nn.sigmoid(z)

    out = jax.block_until_ready(logistic_regression(x, weight, bias))
    assert out.shape == (batch, 1)
    assert jnp.allclose(out, ref_fn(x), atol=1e-5, rtol=1e-5)

    # Second check: ragged batch that exercises multiple grid tiles + padding.
    batch2 = 300
    x2 = jax.random.normal(kx2, (batch2, n_input_features), dtype=jnp.float32)
    out2 = jax.block_until_ready(
        logistic_regression(
            x2, weight, bias, target_tile_bytes=128 * n_input_features * 4
        )
    )
    assert out2.shape == (batch2, 1)
    assert jnp.allclose(out2, ref_fn(x2), atol=1e-5, rtol=1e-5)

    print("KERNEL_OK")
</pallas_src>

<mosaic_0001>
module attributes {stable_mosaic.version = 11 : i64} {
  func.func @logreg_kernel(%arg0: i32, %arg1: memref<128x32xf32, #tpu.memory_space<vmem>>, %arg2: memref<8x32xf32, #tpu.memory_space<vmem>>, %arg3: memref<1x1xf32, #tpu.memory_space<smem>>, %arg4: memref<1x1x128xf32, #tpu.memory_space<vmem>>) attributes {dimension_semantics = [#tpu.dimension_semantics<parallel>], iteration_bounds = array<i64: 1>, scalar_prefetch = 0 : i64, scratch_operands = 0 : i64, tpu.core_type = #tpu.core_type<tc>, window_params = [{transform_indices = @transform_0, window_bounds = array<i64: 128, 32>}, {pipeline_mode = #tpu.pipeline_mode<synchronous>, transform_indices = @transform_1, window_bounds = array<i64: 8, 32>}, {transform_indices = @transform_2, window_bounds = array<i64: 1, 1>}, {transform_indices = @transform_3, window_bounds = array<i64: 1, 1, 128>}]} {
    %c0 = arith.constant 0 : index
    %c0_0 = arith.constant 0 : index
    %0 = vector.load %arg2[%c0, %c0_0] : memref<8x32xf32, #tpu.memory_space<vmem>>, vector<8x32xf32>
    %c0_1 = arith.constant 0 : index
    %c0_2 = arith.constant 0 : index
    %1 = vector.load %arg1[%c0_1, %c0_2] : memref<128x32xf32, #tpu.memory_space<vmem>>, vector<128x32xf32>
    %cst = arith.constant dense<0.000000e+00> : vector<8x128xf32>
    %2 = tpu.matmul %0, %1, %cst {dimension_numbers = #tpu.dot_dimension_numbers<[1], [1], [0], [0], [0, 0, 1, 0], [], []>, precision = #tpu.contract_precision<fp32>} : vector<8x32xf32>, vector<128x32xf32>, vector<8x128xf32> -> vector<8x128xf32>
    %3 = vector.extract_strided_slice %2 {offsets = [0, 0], sizes = [1, 128], strides = [1, 1]} : vector<8x128xf32> to vector<1x128xf32>
    %c0_3 = arith.constant 0 : index
    %c0_4 = arith.constant 0 : index
    %4 = memref.load %arg3[%c0_3, %c0_4] : memref<1x1xf32, #tpu.memory_space<smem>>
    %5 = vector.broadcast %4 : f32 to vector<1x128xf32>
    %6 = arith.addf %3, %5 : vector<1x128xf32>
    %7 = arith.negf %6 : vector<1x128xf32>
    %8 = math.exp %7 : vector<1x128xf32>
    %cst_5 = arith.constant 1.000000e+00 : f32
    %9 = vector.broadcast %cst_5 : f32 to vector<1x128xf32>
    %10 = arith.addf %9, %8 : vector<1x128xf32>
    %11 = arith.divf %9, %10 : vector<1x128xf32>
    %12 = vector.shape_cast %11 : vector<1x128xf32> to vector<1x1x128xf32>
    %c0_6 = arith.constant 0 : index
    %c0_7 = arith.constant 0 : index
    %c0_8 = arith.constant 0 : index
    %13 = vector.load %arg4[%c0_6, %c0_7, %c0_8] : memref<1x1x128xf32, #tpu.memory_space<vmem>>, vector<1x1x128xf32>
    tpu.vector_store %arg4[%c0_6, %c0_7, %c0_8], %12 {strides = array<i32>} : memref<1x1x128xf32, #tpu.memory_space<vmem>>, vector<1x1x128xf32>,
    return
  }
  func.func @transform_0(%arg0: i32) -> (i32, i32) {
    %c0_i32 = arith.constant 0 : i32
    %c0_i32_0 = arith.constant 0 : i32
    return %arg0, %c0_i32 : i32, i32
  }
  func.func @transform_1(%arg0: i32) -> (i32, i32) {
    %c0_i32 = arith.constant 0 : i32
    %c0_i32_0 = arith.constant 0 : i32
    %c0_i32_1 = arith.constant 0 : i32
    return %c0_i32, %c0_i32_0 : i32, i32
  }
  func.func @transform_2(%arg0: i32) -> (i32, i32) {
    %c0_i32 = arith.constant 0 : i32
    %c0_i32_0 = arith.constant 0 : i32
    %c0_i32_1 = arith.constant 0 : i32
    return %c0_i32, %c0_i32_0 : i32, i32
  }
  func.func @transform_3(%arg0: i32) -> (i32, i32, i32) {
    %c0_i32 = arith.constant 0 : i32
    %c0_i32_0 = arith.constant 0 : i32
    %c0_i32_1 = arith.constant 0 : i32
    return %arg0, %c0_i32, %c0_i32_0 : i32, i32, i32
  }
}

</mosaic_0001>

<llo_original>
// kernel: tpu_custom_call.1
$region0: #{tpu_custom_call.1}
  #allocation0 [shape = 'u32[]', space=smem, size = 0x4, offset = 0x4, fixed_abs, tag = 'smem constant byte address 0x4 - core index']
  #allocation1 [shape = 'u32[144,128]{1,0:T(1,128)}', space=vmem, size = 0x12000, scoped, tag = 'internal scratch']
  #allocation2 [shape = 'f32[1,1]{1,0:T(1,128)S(6)}', space=smem, size = 0x200, scoped, tag = 'scoped memory for tpu_custom_call.1']
  %s0 = inlined_call_operand.vmem [shape: f32[128,32], index: 0, kind: input, shape index: {}]
  %s1 = inlined_call_operand.vmem [shape: f32[8,32], index: 1, kind: input, shape index: {}]
  %s2 = inlined_call_operand.<no memory space> [shape: f32[1,1], index: 2, kind: input, shape index: {}]
  %s3 = inlined_call_operand.hbm [shape: f32[1,1,128], index: 3, kind: output, shape index: {}]
  %s4 = sld [smem:[#allocation0]]
  $region22: #{tpu_custom_call.1} parent=0
    _
  %s6 = ssub.s32 1, %s4
  %s7 = scalar_select 0, %s6, %s4
  %8 = sst [smem:[#allocation2]] %s2
  $region1: #{tpu_custom_call.1} parent=0
    #allocation3 [shape = 'u8[512]{0}', space=vmem, size = 0x400, scoped, tag = 'output window, operand 0, single buffered']
    #allocation4 [shape = 's32[1]{0}', space=sflag, size = 0x4, scoped, tag = 'scoped memory for tpu_custom_call.1']
    %9 = vsyncpa [#allocation4], 0
    // Predicated region
    $region2: #{tpu_custom_call.1} parent=1 // pred_check
      _
    $region3: #{tpu_custom_call.1} parent=1 // pred_check_branch
      %11 = sbr.rel (0) target = $region5
    $region4: #{tpu_custom_call.1} parent=1 // pred_region
      _
    $region5: #{tpu_custom_call.1} parent=1 // pred_fallthru
      _
    // Predicated region
    $region6: #{tpu_custom_call.1} parent=1 // pred_check
      _
    $region7: #{tpu_custom_call.1} parent=1 // pred_check_branch
      %13 = sbr.rel (0) target = $region9
    $region8: #{tpu_custom_call.1} parent=1 // pred_region
      _
    $region9: #{tpu_custom_call.1} parent=1 // pred_fallthru
      _
    // Predicated region
    $region10: #{tpu_custom_call.1} parent=1 // pred_check
      _
    $region11: #{tpu_custom_call.1} parent=1 // pred_check_branch
      %15 = sbr.rel (0) target = $region13
    $region12: #{tpu_custom_call.1} parent=1 // pred_region
      _
    $region13: #{tpu_custom_call.1} parent=1 // pred_fallthru
      _
    %v16 = vld [vmem:[%s1] sm:$0xff]
    %v17 = vld [vmem:[%s0] sm:$0xff]
    %v18 = vld [vmem:[%s0 + $0x8] sm:$0xff]
    %v19 = vld [vmem:[%s0 + $0x10] sm:$0xff]
    %v20 = vld [vmem:[%s0 + $0x18] sm:$0xff]
    %v21 = vld [vmem:[%s0 + $0x20] sm:$0xff]
    %v22 = vld [vmem:[%s0 + $0x28] sm:$0xff]
    %v23 = vld [vmem:[%s0 + $0x30] sm:$0xff]
    %v24 = vld [vmem:[%s0 + $0x38] sm:$0xff]
    %v25 = vld [vmem:[%s0 + $0x40] sm:$0xff]
    %v26 = vld [vmem:[%s0 + $0x48] sm:$0xff]
    %v27 = vld [vmem:[%s0 + $0x50] sm:$0xff]
    %v28 = vld [vmem:[%s0 + $0x58] sm:$0xff]
    %v29 = vld [vmem:[%s0 + $0x60] sm:$0xff]
    %v30 = vld [vmem:[%s0 + $0x68] sm:$0xff]
    %v31 = vld [vmem:[%s0 + $0x70] sm:$0xff]
    %v32 = vld [vmem:[%s0 + $0x78] sm:$0xff]
    %vm33 = vcmask 261120
    %v35 = vsel %vm33, %v16, 0
    %v38 = vsel %vm33, %v17, 0
    %v41 = vsel %vm33, %v18, 0
    %v44 = vsel %vm33, %v19, 0
    %v47 = vsel %vm33, %v20, 0
    %v50 = vsel %vm33, %v21, 0
    %v53 = vsel %vm33, %v22, 0
    %v56 = vsel %vm33, %v23, 0
    %v59 = vsel %vm33, %v24, 0
    %v62 = vsel %vm33, %v25, 0
    %v65 = vsel %vm33, %v26, 0
    %v68 = vsel %vm33, %v27, 0
    %v71 = vsel %vm33, %v28, 0
    %v74 = vsel %vm33, %v29, 0
    %v77 = vsel %vm33, %v30, 0
    %v80 = vsel %vm33, %v31, 0
    %v83 = vsel %vm33, %v32, 0
    %85 = vmatprep.subr.mxu0 0.0
    %v86 = vand.u32 %v38, 4294901760
    %87 = vmatpush1.xpose.msra.mxu0 %v86
    %88 = vmatprep.subr.mxu0 0.0
    %v89 = vand.u32 %v41, 4294901760
    %90 = vmatpush1.xpose.msra.mxu0 %v89
    %91 = vmatprep.subr.mxu0 0.0
    %v92 = vand.u32 %v44, 4294901760
    %93 = vmatpush1.xpose.msra.mxu0 %v92
    %94 = vmatprep.subr.mxu0 0.0
    %v95 = vand.u32 %v47, 4294901760
    %96 = vmatpush1.xpose.msra.mxu0 %v95
    %97 = vmatprep.subr.mxu0 0.0
    %v98 = vand.u32 %v50, 4294901760
    %99 = vmatpush1.xpose.msra.mxu0 %v98
    %100 = vmatprep.subr.mxu0 0.0
    %v101 = vand.u32 %v53, 4294901760
    %102 = vmatpush1.xpose.msra.mxu0 %v101
    %103 = vmatprep.subr.mxu0 0.0
    %v104 = vand.u32 %v56, 4294901760
    %105 = vmatpush1.xpose.msra.mxu0 %v104
    %106 = vmatprep.subr.mxu0 0.0
    %v107 = vand.u32 %v59, 4294901760
    %108 = vmatpush1.xpose.msra.mxu0 %v107
    %109 = vmatprep.subr.mxu0 0.0
    %v110 = vand.u32 %v62, 4294901760
    %111 = vmatpush1.xpose.msra.mxu0 %v110
    %112 = vmatprep.subr.mxu0 0.0
    %v113 = vand.u32 %v65, 4294901760
    %114 = vmatpush1.xpose.msra.mxu0 %v113
    %115 = vmatprep.subr.mxu0 0.0
    %v116 = vand.u32 %v68, 4294901760
    %117 = vmatpush1.xpose.msra.mxu0 %v116
    %118 = vmatprep.subr.mxu0 0.0
    %v119 = vand.u32 %v71, 4294901760
    %120 = vmatpush1.xpose.msra.mxu0 %v119
    %121 = vmatprep.subr.mxu0 0.0
    %v122 = vand.u32 %v74, 4294901760
    %123 = vmatpush1.xpose.msra.mxu0 %v122
    %124 = vmatprep.subr.mxu0 0.0
    %v125 = vand.u32 %v77, 4294901760
    %126 = vmatpush1.xpose.msra.mxu0 %v125
    %127 = vmatprep.subr.mxu0 0.0
    %v128 = vand.u32 %v80, 4294901760
    %129 = vmatpush1.xpose.msra.mxu0 %v128
    %130 = vmatprep.subr.mxu0 0.0
    %v131 = vand.u32 %v83, 4294901760
    %132 = vmatpush1.xpose.msra.mxu0 %v131
    %133 = vmatprep.subr.mxu0 0.0
    %134 = vmatpush1.xpose.msra.mxu0 0.0
    %135 = vmatprep.subr.mxu0 0.0
    %136 = vmatpush1.xpose.msra.mxu0 0.0
    %137 = vmatprep.subr.mxu0 0.0
    %138 = vmatpush1.xpose.msra.mxu0 0.0
    %139 = vmatprep.subr.mxu0 0.0
    %140 = vmatpush1.xpose.msra.mxu0 0.0
    %141 = vmatprep.subr.mxu0 0.0
    %142 = vmatpush1.xpose.msra.mxu0 0.0
    %143 = vmatprep.subr.mxu0 0.0
    %144 = vmatpush1.xpose.msra.mxu0 0.0
    %145 = vmatprep.subr.mxu0 0.0
    %146 = vmatpush1.xpose.msra.mxu0 0.0
    %147 = vmatprep.subr.mxu0 0.0
    %148 = vmatpush1.xpose.msra.mxu0 0.0
    %149 = vmatprep.subr.mxu0 0.0
    %150 = vmatpush1.xpose.msra.mxu0 0.0
    %151 = vmatprep.subr.mxu0 0.0
    %152 = vmatpush1.xpose.msra.mxu0 0.0
    %153 = vmatprep.subr.mxu0 0.0
    %154 = vmatpush1.xpose.msra.mxu0 0.0
    %155 = vmatprep.subr.mxu0 0.0
    %156 = vmatpush1.xpose.msra.mxu0 0.0
    %157 = vmatprep.subr.mxu0 0.0
    %158 = vmatpush1.xpose.msra.mxu0 0.0
    %159 = vmatprep.subr.mxu0 0.0
    %160 = vmatpush1.xpose.msra.mxu0 0.0
    %161 = vmatprep.subr.mxu0 0.0
    %162 = vmatpush1.xpose.msra.mxu0 0.0
    %163 = vmatprep.subr.mxu0 0.0
    %164 = vmatpush1.xpose.msra.mxu0 0.0
    %165 = vmatprep.mubr.f32.mxu0 0.0
    %v166 = vand.u32 %v35, 4294901760
    %v167 = vsub.f32 %v35, %v166
    %v168 = vand.u32 %v167, 4294901760
    %v169 = vsub.f32 %v167, %v168
    %v170 = vand.u32 %v169, 4294901760
    %171 = vmatmul.mubr.f32.gmra.mrb[0].mxu0 %v170
    %v172 = vpop.f32.mrb[0].mxu0
    %v173 = vadd.f32 0.0, %v172
    %v174 = vpop.f32.mrb[0].mxu0
    %175 = vdwg.mxu0
    %176 = vmatprep.subr.mxu0 0.0
    %v177 = vand.u32 %v38, 4294901760
    %v178 = vsub.f32 %v38, %v177
    %v179 = vand.u32 %v178, 4294901760
    %v180 = vsub.f32 %v178, %v179
    %v181 = vand.u32 %v180, 4294901760
    %182 = vmatpush1.xpose.msra.mxu0 %v181
    %183 = vmatprep.subr.mxu0 0.0
    %v184 = vand.u32 %v41, 4294901760
    %v185 = vsub.f32 %v41, %v184
    %v186 = vand.u32 %v185, 4294901760
    %v187 = vsub.f32 %v185, %v186
    %v188 = vand.u32 %v187, 4294901760
    %189 = vmatpush1.xpose.msra.mxu0 %v188
    %190 = vmatprep.subr.mxu0 0.0
    %v191 = vand.u32 %v44, 4294901760
    %v192 = vsub.f32 %v44, %v191
    %v193 = vand.u32 %v192, 4294901760
    %v194 = vsub.f32 %v192, %v193
    %v195 = vand.u32 %v194, 4294901760
    %196 = vmatpush1.xpose.msra.mxu0 %v195
    %197 = vmatprep.subr.mxu0 0.0
    %v198 = vand.u32 %v47, 4294901760
    %v199 = vsub.f32 %v47, %v198
    %v200 = vand.u32 %v199, 4294901760
    %v201 = vsub.f32 %v199, %v200
    %v202 = vand.u32 %v201, 4294901760
    %203 = vmatpush1.xpose.msra.mxu0 %v202
    %204 = vmatprep.subr.mxu0 0.0
    %v205 = vand.u32 %v50, 4294901760
    %v206 = vsub.f32 %v50, %v205
    %v207 = vand.u32 %v206, 4294901760
    %v208 = vsub.f32 %v206, %v207
    %v209 = vand.u32 %v208, 4294901760
    %210 = vmatpush1.xpose.msra.mxu0 %v209
    %211 = vmatprep.subr.mxu0 0.0
    %v212 = vand.u32 %v53, 4294901760
    %v213 = vsub.f32 %v53, %v212
    %v214 = vand.u32 %v213, 4294901760
    %v215 = vsub.f32 %v213, %v214
    %v216 = vand.u32 %v215, 4294901760
    %217 = vmatpush1.xpose.msra.mxu0 %v216
    %218 = vmatprep.subr.mxu0 0.0
    %v219 = vand.u32 %v56, 4294901760
    %v220 = vsub.f32 %v56, %v219
    %v221 = vand.u32 %v220, 4294901760
    %v222 = vsub.f32 %v220, %v221
    %v223 = vand.u32 %v222, 4294901760
    %224 = vmatpush1.xpose.msra.mxu0 %v223
    %225 = vmatprep.subr.mxu0 0.0
    %v226 = vand.u32 %v59, 4294901760
    %v227 = vsub.f32 %v59, %v226
    %v228 = vand.u32 %v227, 4294901760
    %v229 = vsub.f32 %v227, %v228
    %v230 = vand.u32 %v229, 4294901760
    %231 = vmatpush1.xpose.msra.mxu0 %v230
    %232 = vmatprep.subr.mxu0 0.0
    %v233 = vand.u32 %v62, 4294901760
    %v234 = vsub.f32 %v62, %v233
    %v235 = vand.u32 %v234, 4294901760
    %v236 = vsub.f32 %v234, %v235
    %v237 = vand.u32 %v236, 4294901760
    %238 = vmatpush1.xpose.msra.mxu0 %v237
    %239 = vmatprep.subr.mxu0 0.0
    %v240 = vand.u32 %v65, 4294901760
    %v241 = vsub.f32 %v65, %v240
    %v242 = vand.u32 %v241, 4294901760
    %v243 = vsub.f32 %v241, %v242
    %v244 = vand.u32 %v243, 4294901760
    %245 = vmatpush1.xpose.msra.mxu0 %v244
    %246 = vmatprep.subr.mxu0 0.0
    %v247 = vand.u32 %v68, 4294901760
    %v248 = vsub.f32 %v68, %v247
    %v249 = vand.u32 %v248, 4294901760
    %v250 = vsub.f32 %v248, %v249
    %v251 = vand.u32 %v250, 4294901760
    %252 = vmatpush1.xpose.msra.mxu0 %v251
    %253 = vmatprep.subr.mxu0 0.0
    %v254 = vand.u32 %v71, 4294901760
    %v255 = vsub.f32 %v71, %v254
    %v256 = vand.u32 %v255, 4294901760
    %v257 = vsub.f32 %v255, %v256
    %v258 = vand.u32 %v257, 4294901760
    %259 = vmatpush1.xpose.msra.mxu0 %v258
    %260 = vmatprep.subr.mxu0 0.0
    %v261 = vand.u32 %v74, 4294901760
    %v262 = vsub.f32 %v74, %v261
    %v263 = vand.u32 %v262, 4294901760
    %v264 = vsub.f32 %v262, %v263
    %v265 = vand.u32 %v264, 4294901760
    %266 = vmatpush1.xpose.msra.mxu0 %v265
    %267 = vmatprep.subr.mxu0 0.0
    %v268 = vand.u32 %v77, 4294901760
    %v269 = vsub.f32 %v77, %v268
    %v270 = vand.u32 %v269, 4294901760
    %v271 = vsub.f32 %v269, %v270
    %v272 = vand.u32 %v271, 4294901760
    %273 = vmatpush1.xpose.msra.mxu0 %v272
    %274 = vmatprep.subr.mxu0 0.0
    %v275 = vand.u32 %v80, 4294901760
    %v276 = vsub.f32 %v80, %v275
    %v277 = vand.u32 %v276, 4294901760
    %v278 = vsub.f32 %v276, %v277
    %v279 = vand.u32 %v278, 4294901760
    %280 = vmatpush1.xpose.msra.mxu0 %v279
    %281 = vmatprep.subr.mxu0 0.0
    %v282 = vand.u32 %v83, 4294901760
    %v283 = vsub.f32 %v83, %v282
    %v284 = vand.u32 %v283, 4294901760
    %v285 = vsub.f32 %v283, %v284
    %v286 = vand.u32 %v285, 4294901760
    %287 = vmatpush1.xpose.msra.mxu0 %v286
    %288 = vmatprep.subr.mxu0 0.0
    %289 = vmatpush1.xpose.msra.mxu0 0.0
    %290 = vmatprep.subr.mxu0 0.0
    %291 = vmatpush1.xpose.msra.mxu0 0.0
    %292 = vmatprep.subr.mxu0 0.0
    %293 = vmatpush1.xpose.msra.mxu0 0.0
    %294 = vmatprep.subr.mxu0 0.0
    %295 = vmatpush1.xpose.msra.mxu0 0.0
    %296 = vmatprep.subr.mxu0 0.0
    %297 = vmatpush1.xpose.msra.mxu0 0.0
    %298 = vmatprep.subr.mxu0 0.0
    %299 = vmatpush1.xpose.msra.mxu0 0.0
    %300 = vmatprep.subr.mxu0 0.0
    %301 = vmatpush1.xpose.msra.mxu0 0.0
    %302 = vmatprep.subr.mxu0 0.0
    %303 = vmatpush1.xpose.msra.mxu0 0.0
    %304 = vmatprep.subr.mxu0 0.0
    %305 = vmatpush1.xpose.msra.mxu0 0.0
    %306 = vmatprep.subr.mxu0 0.0
    %307 = vmatpush1.xpose.msra.mxu0 0.0
    %308 = vmatprep.subr.mxu0 0.0
    %309 = vmatpush1.xpose.msra.mxu0 0.0
    %310 = vmatprep.subr.mxu0 0.0
    %311 = vmatpush1.xpose.msra.mxu0 0.0
    %312 = vmatprep.subr.mxu0 0.0
    %313 = vmatpush1.xpose.msra.mxu0 0.0
    %314 = vmatprep.subr.mxu0 0.0
    %315 = vmatpush1.xpose.msra.mxu0 0.0
    %316 = vmatprep.subr.mxu0 0.0
    %317 = vmatpush1.xpose.msra.mxu0 0.0
    %318 = vmatprep.subr.mxu0 0.0
    %319 = vmatpush1.xpose.msra.mxu0 0.0
    %320 = vmatprep.mubr.f32.mxu0 0.0
    %v321 = vand.u32 %v35, 4294901760
    %322 = vmatmul.mubr.f32.gmra.mrb[0].mxu0 %v321
    %v323 = vpop.f32.mrb[0].mxu0
    %v324 = vadd.f32 %v173, %v323
    %v325 = vpop.f32.mrb[0].mxu0
    %326 = vdwg.mxu0
    %327 = vmatprep.subr.mxu0 0.0
    %v328 = vand.u32 %v38, 4294901760
    %v329 = vsub.f32 %v38, %v328
    %330 = vmatpush1.xpose.msra.mxu0 %v329
    %331 = vmatprep.subr.mxu0 0.0
    %v332 = vand.u32 %v41, 4294901760
    %v333 = vsub.f32 %v41, %v332
    %334 = vmatpush1.xpose.msra.mxu0 %v333
    %335 = vmatprep.subr.mxu0 0.0
    %v336 = vand.u32 %v44, 4294901760
    %v337 = vsub.f32 %v44, %v336
    %338 = vmatpush1.xpose.msra.mxu0 %v337
    %339 = vmatprep.subr.mxu0 0.0
    %v340 = vand.u32 %v47, 4294901760
    %v341 = vsub.f32 %v47, %v340
    %342 = vmatpush1.xpose.msra.mxu0 %v341
    %343 = vmatprep.subr.mxu0 0.0
    %v344 = vand.u32 %v50, 4294901760
    %v345 = vsub.f32 %v50, %v344
    %346 = vmatpush1.xpose.msra.mxu0 %v345
    %347 = vmatprep.subr.mxu0 0.0
    %v348 = vand.u32 %v53, 4294901760
    %v349 = vsub.f32 %v53, %v348
    %350 = vmatpush1.xpose.msra.mxu0 %v349
    %351 = vmatprep.subr.mxu0 0.0
    %v352 = vand.u32 %v56, 4294901760
    %v353 = vsub.f32 %v56, %v352
    %354 = vmatpush1.xpose.msra.mxu0 %v353
    %355 = vmatprep.subr.mxu0 0.0
    %v356 = vand.u32 %v59, 4294901760
    %v357 = vsub.f32 %v59, %v356
    %358 = vmatpush1.xpose.msra.mxu0 %v357
    %359 = vmatprep.subr.mxu0 0.0
    %v360 = vand.u32 %v62, 4294901760
    %v361 = vsub.f32 %v62, %v360
    %362 = vmatpush1.xpose.msra.mxu0 %v361
    %363 = vmatprep.subr.mxu0 0.0
    %v364 = vand.u32 %v65, 4294901760
    %v365 = vsub.f32 %v65, %v364
    %366 = vmatpush1.xpose.msra.mxu0 %v365
    %367 = vmatprep.subr.mxu0 0.0
    %v368 = vand.u32 %v68, 4294901760
    %v369 = vsub.f32 %v68, %v368
    %370 = vmatpush1.xpose.msra.mxu0 %v369
    %371 = vmatprep.subr.mxu0 0.0
    %v372 = vand.u32 %v71, 4294901760
    %v373 = vsub.f32 %v71, %v372
    %374 = vmatpush1.xpose.msra.mxu0 %v373
    %375 = vmatprep.subr.mxu0 0.0
    %v376 = vand.u32 %v74, 4294901760
    %v377 = vsub.f32 %v74, %v376
    %378 = vmatpush1.xpose.msra.mxu0 %v377
    %379 = vmatprep.subr.mxu0 0.0
    %v380 = vand.u32 %v77, 4294901760
    %v381 = vsub.f32 %v77, %v380
    %382 = vmatpush1.xpose.msra.mxu0 %v381
    %383 = vmatprep.subr.mxu0 0.0
    %v384 = vand.u32 %v80, 4294901760
    %v385 = vsub.f32 %v80, %v384
    %386 = vmatpush1.xpose.msra.mxu0 %v385
    %387 = vmatprep.subr.mxu0 0.0
    %v388 = vand.u32 %v83, 4294901760
    %v389 = vsub.f32 %v83, %v388
    %390 = vmatpush1.xpose.msra.mxu0 %v389
    %391 = vmatprep.subr.mxu0 0.0
    %392 = vmatpush1.xpose.msra.mxu0 0.0
    %393 = vmatprep.subr.mxu0 0.0
    %394 = vmatpush1.xpose.msra.mxu0 0.0
    %395 = vmatprep.subr.mxu0 0.0
    %396 = vmatpush1.xpose.msra.mxu0 0.0
    %397 = vmatprep.subr.mxu0 0.0
    %398 = vmatpush1.xpose.msra.mxu0 0.0
    %399 = vmatprep.subr.mxu0 0.0
    %400 = vmatpush1.xpose.msra.mxu0 0.0
    %401 = vmatprep.subr.mxu0 0.0
    %402 = vmatpush1.xpose.msra.mxu0 0.0
    %403 = vmatprep.subr.mxu0 0.0
    %404 = vmatpush1.xpose.msra.mxu0 0.0
    %405 = vmatprep.subr.mxu0 0.0
    %406 = vmatpush1.xpose.msra.mxu0 0.0
    %407 = vmatprep.subr.mxu0 0.0
    %408 = vmatpush1.xpose.msra.mxu0 0.0
    %409 = vmatprep.subr.mxu0 0.0
    %410 = vmatpush1.xpose.msra.mxu0 0.0
    %411 = vmatprep.subr.mxu0 0.0
    %412 = vmatpush1.xpose.msra.mxu0 0.0
    %413 = vmatprep.subr.mxu0 0.0
    %414 = vmatpush1.xpose.msra.mxu0 0.0
    %415 = vmatprep.subr.mxu0 0.0
    %416 = vmatpush1.xpose.msra.mxu0 0.0
    %417 = vmatprep.subr.mxu0 0.0
    %418 = vmatpush1.xpose.msra.mxu0 0.0
    %419 = vmatprep.subr.mxu0 0.0
    %420 = vmatpush1.xpose.msra.mxu0 0.0
    %421 = vmatprep.subr.mxu0 0.0
    %422 = vmatpush1.xpose.msra.mxu0 0.0
    %423 = vmatprep.mubr.f32.mxu0 0.0
    %v424 = vand.u32 %v35, 4294901760
    %v425 = vsub.f32 %v35, %v424
    %426 = vmatmul.mubr.f32.gmra.mrb[0].mxu0 %v425
    %v427 = vpop.f32.mrb[0].mxu0
    %v428 = vadd.f32 %v324, %v427
    %v429 = vpop.f32.mrb[0].mxu0
    %430 = vdwg.mxu0
    %431 = vmatprep.subr.mxu0 0.0
    %v432 = vand.u32 %v38, 4294901760
    %433 = vmatpush1.xpose.msra.mxu0 %v432
    %434 = vmatprep.subr.mxu0 0.0
    %v435 = vand.u32 %v41, 4294901760
    %436 = vmatpush1.xpose.msra.mxu0 %v435
    %437 = vmatprep.subr.mxu0 0.0
    %v438 = vand.u32 %v44, 4294901760
    %439 = vmatpush1.xpose.msra.mxu0 %v438
    %440 = vmatprep.subr.mxu0 0.0
    %v441 = vand.u32 %v47, 4294901760
    %442 = vmatpush1.xpose.msra.mxu0 %v441
    %443 = vmatprep.subr.mxu0 0.0
    %v444 = vand.u32 %v50, 4294901760
    %445 = vmatpush1.xpose.msra.mxu0 %v444
    %446 = vmatprep.subr.mxu0 0.0
    %v447 = vand.u32 %v53, 4294901760
    %448 = vmatpush1.xpose.msra.mxu0 %v447
    %449 = vmatprep.subr.mxu0 0.0
    %v450 = vand.u32 %v56, 4294901760
    %451 = vmatpush1.xpose.msra.mxu0 %v450
    %452 = vmatprep.subr.mxu0 0.0
    %v453 = vand.u32 %v59, 4294901760
    %454 = vmatpush1.xpose.msra.mxu0 %v453
    %455 = vmatprep.subr.mxu0 0.0
    %v456 = vand.u32 %v62, 4294901760
    %457 = vmatpush1.xpose.msra.mxu0 %v456
    %458 = vmatprep.subr.mxu0 0.0
    %v459 = vand.u32 %v65, 4294901760
    %460 = vmatpush1.xpose.msra.mxu0 %v459
    %461 = vmatprep.subr.mxu0 0.0
    %v462 = vand.u32 %v68, 4294901760
    %463 = vmatpush1.xpose.msra.mxu0 %v462
    %464 = vmatprep.subr.mxu0 0.0
    %v465 = vand.u32 %v71, 4294901760
    %466 = vmatpush1.xpose.msra.mxu0 %v465
    %467 = vmatprep.subr.mxu0 0.0
    %v468 = vand.u32 %v74, 4294901760
    %469 = vmatpush1.xpose.msra.mxu0 %v468
    %470 = vmatprep.subr.mxu0 0.0
    %v471 = vand.u32 %v77, 4294901760
    %472 = vmatpush1.xpose.msra.mxu0 %v471
    %473 = vmatprep.subr.mxu0 0.0
    %v474 = vand.u32 %v80, 4294901760
    %475 = vmatpush1.xpose.msra.mxu0 %v474
    %476 = vmatprep.subr.mxu0 0.0
    %v477 = vand.u32 %v83, 4294901760
    %478 = vmatpush1.xpose.msra.mxu0 %v477
    %479 = vmatprep.subr.mxu0 0.0
    %480 = vmatpush1.xpose.msra.mxu0 0.0
    %481 = vmatprep.subr.mxu0 0.0
    %482 = vmatpush1.xpose.msra.mxu0 0.0
    %483 = vmatprep.subr.mxu0 0.0
    %484 = vmatpush1.xpose.msra.mxu0 0.0
    %485 = vmatprep.subr.mxu0 0.0
    %486 = vmatpush1.xpose.msra.mxu0 0.0
    %487 = vmatprep.subr.mxu0 0.0
    %488 = vmatpush1.xpose.msra.mxu0 0.0
    %489 = vmatprep.subr.mxu0 0.0
    %490 = vmatpush1.xpose.msra.mxu0 0.0
    %491 = vmatprep.subr.mxu0 0.0
    %492 = vmatpush1.xpose.msra.mxu0 0.0
    %493 = vmatprep.subr.mxu0 0.0
    %494 = vmatpush1.xpose.msra.mxu0 0.0
    %495 = vmatprep.subr.mxu0 0.0
    %496 = vmatpush1.xpose.msra.mxu0 0.0
    %497 = vmatprep.subr.mxu0 0.0
    %498 = vmatpush1.xpose.msra.mxu0 0.0
    %499 = vmatprep.subr.mxu0 0.0
    %500 = vmatpush1.xpose.msra.mxu0 0.0
    %501 = vmatprep.subr.mxu0 0.0
    %502 = vmatpush1.xpose.msra.mxu0 0.0
    %503 = vmatprep.subr.mxu0 0.0
    %504 = vmatpush1.xpose.msra.mxu0 0.0
    %505 = vmatprep.subr.mxu0 0.0
    %506 = vmatpush1.xpose.msra.mxu0 0.0
    %507 = vmatprep.subr.mxu0 0.0
    %508 = vmatpush1.xpose.msra.mxu0 0.0
    %509 = vmatprep.subr.mxu0 0.0
    %510 = vmatpush1.xpose.msra.mxu0 0.0
    %511 = vmatprep.mubr.f32.mxu0 0.0
    %v512 = vand.u32 %v35, 4294901760
    %v513 = vsub.f32 %v35, %v512
    %v514 = vand.u32 %v513, 4294901760
    %515 = vmatmul.mubr.f32.gmra.mrb[0].mxu0 %v514
    %v516 = vpop.f32.mrb[0].mxu0
    %v517 = vadd.f32 %v428, %v516
    %v518 = vpop.f32.mrb[0].mxu0
    %519 = vdwg.mxu0
    %520 = vmatprep.subr.mxu0 0.0
    %v521 = vand.u32 %v38, 4294901760
    %v522 = vsub.f32 %v38, %v521
    %v523 = vand.u32 %v522, 4294901760
    %524 = vmatpush1.xpose.msra.mxu0 %v523
    %525 = vmatprep.subr.mxu0 0.0
    %v526 = vand.u32 %v41, 4294901760
    %v527 = vsub.f32 %v41, %v526
    %v528 = vand.u32 %v527, 4294901760
    %529 = vmatpush1.xpose.msra.mxu0 %v528
    %530 = vmatprep.subr.mxu0 0.0
    %v531 = vand.u32 %v44, 4294901760
    %v532 = vsub.f32 %v44, %v531
    %v533 = vand.u32 %v532, 4294901760
    %534 = vmatpush1.xpose.msra.mxu0 %v533
    %535 = vmatprep.subr.mxu0 0.0
    %v536 = vand.u32 %v47, 4294901760
    %v537 = vsub.f32 %v47, %v536
    %v538 = vand.u32 %v537, 4294901760
    %539 = vmatpush1.xpose.msra.mxu0 %v538
    %540 = vmatprep.subr.mxu0 0.0
    %v541 = vand.u32 %v50, 4294901760
    %v542 = vsub.f32 %v50, %v541
    %v543 = vand.u32 %v542, 4294901760
    %544 = vmatpush1.xpose.msra.mxu0 %v543
    %545 = vmatprep.subr.mxu0 0.0
    %v546 = vand.u32 %v53, 4294901760
    %v547 = vsub.f32 %v53, %v546
    %v548 = vand.u32 %v547, 4294901760
    %549 = vmatpush1.xpose.msra.mxu0 %v548
    %550 = vmatprep.subr.mxu0 0.0
    %v551 = vand.u32 %v56, 4294901760
    %v552 = vsub.f32 %v56, %v551
    %v553 = vand.u32 %v552, 4294901760
    %554 = vmatpush1.xpose.msra.mxu0 %v553
    %555 = vmatprep.subr.mxu0 0.0
    %v556 = vand.u32 %v59, 4294901760
    %v557 = vsub.f32 %v59, %v556
    %v558 = vand.u32 %v557, 4294901760
    %559 = vmatpush1.xpose.msra.mxu0 %v558
    %560 = vmatprep.subr.mxu0 0.0
    %v561 = vand.u32 %v62, 4294901760
    %v562 = vsub.f32 %v62, %v561
    %v563 = vand.u32 %v562, 4294901760
    %564 = vmatpush1.xpose.msra.mxu0 %v563
    %565 = vmatprep.subr.mxu0 0.0
    %v566 = vand.u32 %v65, 4294901760
    %v567 = vsub.f32 %v65, %v566
    %v568 = vand.u32 %v567, 4294901760
    %569 = vmatpush1.xpose.msra.mxu0 %v568
    %570 = vmatprep.subr.mxu0 0.0
    %v571 = vand.u32 %v68, 4294901760
    %v572 = vsub.f32 %v68, %v571
    %v573 = vand.u32 %v572, 4294901760
    %574 = vmatpush1.xpose.msra.mxu0 %v573
    %575 = vmatprep.subr.mxu0 0.0
    %v576 = vand.u32 %v71, 4294901760
    %v577 = vsub.f32 %v71, %v576
    %v578 = vand.u32 %v577, 4294901760
    %579 = vmatpush1.xpose.msra.mxu0 %v578
    %580 = vmatprep.subr.mxu0 0.0
    %v581 = vand.u32 %v74, 4294901760
    %v582 = vsub.f32 %v74, %v581
    %v583 = vand.u32 %v582, 4294901760
    %584 = vmatpush1.xpose.msra.mxu0 %v583
    %585 = vmatprep.subr.mxu0 0.0
    %v586 = vand.u32 %v77, 4294901760
    %v587 = vsub.f32 %v77, %v586
    %v588 = vand.u32 %v587, 4294901760
    %589 = vmatpush1.xpose.msra.mxu0 %v588
    %590 = vmatprep.subr.mxu0 0.0
    %v591 = vand.u32 %v80, 4294901760
    %v592 = vsub.f32 %v80, %v591
    %v593 = vand.u32 %v592, 4294901760
    %594 = vmatpush1.xpose.msra.mxu0 %v593
    %595 = vmatprep.subr.mxu0 0.0
    %v596 = vand.u32 %v83, 4294901760
    %v597 = vsub.f32 %v83, %v596
    %v598 = vand.u32 %v597, 4294901760
    %599 = vmatpush1.xpose.msra.mxu0 %v598
    %600 = vmatprep.subr.mxu0 0.0
    %601 = vmatpush1.xpose.msra.mxu0 0.0
    %602 = vmatprep.subr.mxu0 0.0
    %603 = vmatpush1.xpose.msra.mxu0 0.0
    %604 = vmatprep.subr.mxu0 0.0
    %605 = vmatpush1.xpose.msra.mxu0 0.0
    %606 = vmatprep.subr.mxu0 0.0
    %607 = vmatpush1.xpose.msra.mxu0 0.0
    %608 = vmatprep.subr.mxu0 0.0
    %609 = vmatpush1.xpose.msra.mxu0 0.0
    %610 = vmatprep.subr.mxu0 0.0
    %611 = vmatpush1.xpose.msra.mxu0 0.0
    %612 = vmatprep.subr.mxu0 0.0
    %613 = vmatpush1.xpose.msra.mxu0 0.0
    %614 = vmatprep.subr.mxu0 0.0
    %615 = vmatpush1.xpose.msra.mxu0 0.0
    %616 = vmatprep.subr.mxu0 0.0
    %617 = vmatpush1.xpose.msra.mxu0 0.0
    %618 = vmatprep.subr.mxu0 0.0
    %619 = vmatpush1.xpose.msra.mxu0 0.0
    %620 = vmatprep.subr.mxu0 0.0
    %621 = vmatpush1.xpose.msra.mxu0 0.0
    %622 = vmatprep.subr.mxu0 0.0
    %623 = vmatpush1.xpose.msra.mxu0 0.0
    %624 = vmatprep.subr.mxu0 0.0
    %625 = vmatpush1.xpose.msra.mxu0 0.0
    %626 = vmatprep.subr.mxu0 0.0
    %627 = vmatpush1.xpose.msra.mxu0 0.0
    %628 = vmatprep.subr.mxu0 0.0
    %629 = vmatpush1.xpose.msra.mxu0 0.0
    %630 = vmatprep.subr.mxu0 0.0
    %631 = vmatpush1.xpose.msra.mxu0 0.0
    %632 = vmatprep.mubr.f32.mxu0 0.0
    %v633 = vand.u32 %v35, 4294901760
    %634 = vmatmul.mubr.f32.gmra.mrb[0].mxu0 %v633
    %v635 = vpop.f32.mrb[0].mxu0
    %v636 = vadd.f32 %v517, %v635
    %v637 = vpop.f32.mrb[0].mxu0
    %638 = vdwg.mxu0
    %639 = vmatprep.subr.mxu0 0.0
    %v640 = vand.u32 %v38, 4294901760
    %641 = vmatpush1.xpose.msra.mxu0 %v640
    %642 = vmatprep.subr.mxu0 0.0
    %v643 = vand.u32 %v41, 4294901760
    %644 = vmatpush1.xpose.msra.mxu0 %v643
    %645 = vmatprep.subr.mxu0 0.0
    %v646 = vand.u32 %v44, 4294901760
    %647 = vmatpush1.xpose.msra.mxu0 %v646
    %648 = vmatprep.subr.mxu0 0.0
    %v649 = vand.u32 %v47, 4294901760
    %650 = vmatpush1.xpose.msra.mxu0 %v649
    %651 = vmatprep.subr.mxu0 0.0
    %v652 = vand.u32 %v50, 4294901760
    %653 = vmatpush1.xpose.msra.mxu0 %v652
    %654 = vmatprep.subr.mxu0 0.0
    %v655 = vand.u32 %v53, 4294901760
    %656 = vmatpush1.xpose.msra.mxu0 %v655
    %657 = vmatprep.subr.mxu0 0.0
    %v658 = vand.u32 %v56, 4294901760
    %659 = vmatpush1.xpose.msra.mxu0 %v658
    %660 = vmatprep.subr.mxu0 0.0
    %v661 = vand.u32 %v59, 4294901760
    %662 = vmatpush1.xpose.msra.mxu0 %v661
    %663 = vmatprep.subr.mxu0 0.0
    %v664 = vand.u32 %v62, 4294901760
    %665 = vmatpush1.xpose.msra.mxu0 %v664
    %666 = vmatprep.subr.mxu0 0.0
    %v667 = vand.u32 %v65, 4294901760
    %668 = vmatpush1.xpose.msra.mxu0 %v667
    %669 = vmatprep.subr.mxu0 0.0
    %v670 = vand.u32 %v68, 4294901760
    %671 = vmatpush1.xpose.msra.mxu0 %v670
    %672 = vmatprep.subr.mxu0 0.0
    %v673 = vand.u32 %v71, 4294901760
    %674 = vmatpush1.xpose.msra.mxu0 %v673
    %675 = vmatprep.subr.mxu0 0.0
    %v676 = vand.u32 %v74, 4294901760
    %677 = vmatpush1.xpose.msra.mxu0 %v676
    %678 = vmatprep.subr.mxu0 0.0
    %v679 = vand.u32 %v77, 4294901760
    %680 = vmatpush1.xpose.msra.mxu0 %v679
    %681 = vmatprep.subr.mxu0 0.0
    %v682 = vand.u32 %v80, 4294901760
    %683 = vmatpush1.xpose.msra.mxu0 %v682
    %684 = vmatprep.subr.mxu0 0.0
    %v685 = vand.u32 %v83, 4294901760
    %686 = vmatpush1.xpose.msra.mxu0 %v685
    %687 = vmatprep.subr.mxu0 0.0
    %688 = vmatpush1.xpose.msra.mxu0 0.0
    %689 = vmatprep.subr.mxu0 0.0
    %690 = vmatpush1.xpose.msra.mxu0 0.0
    %691 = vmatprep.subr.mxu0 0.0
    %692 = vmatpush1.xpose.msra.mxu0 0.0
    %693 = vmatprep.subr.mxu0 0.0
    %694 = vmatpush1.xpose.msra.mxu0 0.0
    %695 = vmatprep.subr.mxu0 0.0
    %696 = vmatpush1.xpose.msra.mxu0 0.0
    %697 = vmatprep.subr.mxu0 0.0
    %698 = vmatpush1.xpose.msra.mxu0 0.0
    %699 = vmatprep.subr.mxu0 0.0
    %700 = vmatpush1.xpose.msra.mxu0 0.0
    %701 = vmatprep.subr.mxu0 0.0
    %702 = vmatpush1.xpose.msra.mxu0 0.0
    %703 = vmatprep.subr.mxu0 0.0
    %704 = vmatpush1.xpose.msra.mxu0 0.0
    %705 = vmatprep.subr.mxu0 0.0
    %706 = vmatpush1.xpose.msra.mxu0 0.0
    %707 = vmatprep.subr.mxu0 0.0
    %708 = vmatpush1.xpose.msra.mxu0 0.0
    %709 = vmatprep.subr.mxu0 0.0
    %710 = vmatpush1.xpose.msra.mxu0 0.0
    %711 = vmatprep.subr.mxu0 0.0
    %712 = vmatpush1.xpose.msra.mxu0 0.0
    %713 = vmatprep.subr.mxu0 0.0
    %714 = vmatpush1.xpose.msra.mxu0 0.0
    %715 = vmatprep.subr.mxu0 0.0
    %716 = vmatpush1.xpose.msra.mxu0 0.0
    %717 = vmatprep.subr.mxu0 0.0
    %718 = vmatpush1.xpose.msra.mxu0 0.0
    %719 = vmatprep.mubr.f32.mxu0 0.0
    %v720 = vand.u32 %v35, 4294901760
    %721 = vmatmul.mubr.f32.gmra.mrb[0].mxu0 %v720
    %v722 = vpop.f32.mrb[0].mxu0
    %v723 = vadd.f32 %v636, %v722
    %v724 = vpop.f32.mrb[0].mxu0
    %725 = vdwg.mxu0
    %s726 = sld [smem:[#allocation2]]
    %v727 = vstv %s726
    %v728 = vadd.f32 %v723, %v727
    %v729 = vxor.u32 %v728, 2147483648
    %v730 = vmul.f32 %v729, 1.442695
    %v731 = vpow.pop %v730
    %v732 = vadd.f32 %v731, 1.0
    %v733 = vrcp.pop %v732
    %v734 = vmul.f32 1.0, %v733
    %735 = vst [vmem:[#allocation3] sm:$0x1] %v734
    // Predicated region
    $region14: #{tpu_custom_call.1} parent=1 // pred_check
      _
    $region15: #{tpu_custom_call.1} parent=1 // pred_check_branch
      %737 = sbr.rel (0) target = $region17
    $region16: #{tpu_custom_call.1} parent=1 // pred_region
      %s739 = ssub.s32 16, 16
      %740 = vsyncadd [#allocation4], %s739
      %s742 = sshll.u32 [#allocation3], 4
      %s743 = int_to_ptr.vmem [resolvable:$true] %s742
      %745 = dma.vmem_to_hbm [thread:$0]  %s743, 16, %s3, [#allocation4]
    $region17: #{tpu_custom_call.1} parent=1 // pred_fallthru
      _
    // Predicated region
    $region18: #{tpu_custom_call.1} parent=1 // pred_check
      _
    $region19: #{tpu_custom_call.1} parent=1 // pred_check_branch
      %747 = sbr.rel (0) target = $region21
    $region20: #{tpu_custom_call.1} parent=1 // pred_region
      %748 = dma.done [#allocation4], 16
    $region21: #{tpu_custom_call.1} parent=1 // pred_fallthru
      _
    %749 = vsyncpa [#allocation4], 1

</llo_original>
